<compile_context>
chip_gen: v7x
topology: tpu7x:2x2x1
jax: 0.10.0
libtpu: 0.0.40
codegen_flags: <defaults>
</compile_context>

<pallas_src>
import functools

import jax
import jax.numpy as jnp
from jax.experimental import pallas as pl
from jax.experimental.pallas import tpu as pltpu


def _round_up(n, m):
    return ((n + m - 1) // m) * m


def _mlp_kernel(x_ref,
                w1_ref, b1_ref,
                w2_ref, b2_ref,
                w3_ref, b3_ref,
                w4_ref, b4_ref,
                o_ref, *, use_bf16):
    x = x_ref[...]                                           # [TB, 3] f32

    # fc1 on the VPU: a K=3 contraction would be padded to the full MXU depth
    # and run at ~1-2% efficiency; three broadcast FMAs are cheaper and leave
    # the MXU free for the 64-wide layers.
    w1 = w1_ref[...]                                         # [3, 64]
    b1 = b1_ref[...]                                         # [1, 64]
    h = (x[:, 0:1] * w1[0:1, :]
         + x[:, 1:2] * w1[1:2, :]
         + x[:, 2:3] * w1[2:3, :]
         + b1)
    h = jnp.maximum(h, 0.0)                                  # [TB, 64]

    def mm(a, w_ref):
        w = w_ref[...]
        if use_bf16:
            a = a.astype(jnp.bfloat16)
            w = w.astype(jnp.bfloat16)
        return jnp.dot(a, w, preferred_element_type=jnp.float32)

    # fc2 + relu
    h = jnp.maximum(mm(h, w2_ref) + b2_ref[...], 0.0)        # [TB, 64]
    # fc3 + relu
    h = jnp.maximum(mm(h, w3_ref) + b3_ref[...], 0.0)        # [TB, 64]
    # fc4: true output width (2); store is narrow but writes only the real bytes.
    y = mm(h, w4_ref) + b4_ref[...]                          # [TB, 2]

    o_ref[...] = y.astype(o_ref.dtype)


def net_forward(x, params, *, tile_b=2048, use_bf16=False):
    """x: [B, 3] float32. params: (in,out) weights and (1,out) biases."""
    B, F = x.shape
    assert F == 3, f"expected 3 input features, got {F}"
    out_dim = params["w4"].shape[1]

    # Batch tile: multiple of 8 (sublane), clamped to the (padded) batch.
    tb = min(tile_b, _round_up(B, 8))
    tb = _round_up(tb, 8)
    B_pad = _round_up(B, tb)
    if B_pad != B:
        x = jnp.pad(x, ((0, B_pad - B), (0, 0)))

    grid = (B_pad // tb,)

    # Weights/biases: constant index_map -> DMA'd once, VMEM-resident across steps.
    const = lambda a: pl.BlockSpec(a.shape, lambda i: (0, 0))

    kernel = functools.partial(_mlp_kernel, use_bf16=use_bf16)

    out = pl.pallas_call(
        kernel,
        out_shape=jax.ShapeDtypeStruct((B_pad, out_dim), jnp.float32),
        grid=grid,
        in_specs=[pl.BlockSpec((tb, 3), lambda i: (i, 0)),
                  const(params["w1"]), const(params["b1"]),
                  const(params["w2"]), const(params["b2"]),
                  const(params["w3"]), const(params["b3"]),
                  const(params["w4"]), const(params["b4"])],
        out_specs=pl.BlockSpec((tb, out_dim), lambda i: (i, 0)),
        compiler_params=pltpu.CompilerParams(
            dimension_semantics=("parallel",)),   # megacore sharding on v7x
    )(x, params["w1"], params["b1"],
      params["w2"], params["b2"],
      params["w3"], params["b3"],
      params["w4"], params["b4"])

    return out[:B, :]


def init_params(key):
    """Deterministic init matching nn.Linear shapes (weights stored transposed)."""
    dims = [(3, 64), (64, 64), (64, 64), (64, 2)]
    params = {}
    keys = jax.random.split(key, 2 * len(dims))
    for i, (fan_in, fan_out) in enumerate(dims):
        bound = 1.0 / jnp.sqrt(float(fan_in))  # PyTorch default uniform bound
        w = jax.random.uniform(keys[2 * i], (fan_in, fan_out),
                               minval=-bound, maxval=bound, dtype=jnp.float32)
        b = jax.random.uniform(keys[2 * i + 1], (1, fan_out),
                               minval=-bound, maxval=bound, dtype=jnp.float32)
        params[f"w{i + 1}"] = w
        params[f"b{i + 1}"] = b
    return params


def reference_forward(x, params):
    h = jnp.maximum(x @ params["w1"] + params["b1"], 0.0)
    h = jnp.maximum(h @ params["w2"] + params["b2"], 0.0)
    h = jnp.maximum(h @ params["w3"] + params["b3"], 0.0)
    return h @ params["w4"] + params["b4"]


if __name__ == "__main__":
    key = jax.random.PRNGKey(0)
    k_params, k_x1, k_x2, k_x3 = jax.random.split(key, 4)

    params = init_params(k_params)

    # Case 1: small batch (single tile), matches the original demo scale.
    x1 = jax.random.normal(k_x1, (8, 3), dtype=jnp.float32)
    out1 = jax.block_until_ready(net_forward(x1, params))
    ref1 = reference_forward(x1, params)
    assert out1.shape == (8, 2), out1.shape
    assert jnp.allclose(out1, ref1, atol=1e-5, rtol=1e-5), "mismatch (B=8)"

    # Case 2: non-multiple-of-8 batch with multiple grid steps (pipelined path).
    x2 = jax.random.normal(k_x2, (37, 3), dtype=jnp.float32)
    out2 = jax.block_until_ready(net_forward(x2, params, tile_b=16))
    ref2 = reference_forward(x2, params)
    assert out2.shape == (37, 2), out2.shape
    assert jnp.allclose(out2, ref2, atol=1e-5, rtol=1e-5), "mismatch (B=37)"

    # Case 3: moderate batch, several 128-row tiles (exercises narrow-output DMA).
    x3 = jax.random.normal(k_x3, (300, 3), dtype=jnp.float32)
    out3 = jax.block_until_ready(net_forward(x3, params, tile_b=128))
    ref3 = reference_forward(x3, params)
    assert out3.shape == (300, 2), out3.shape
    assert jnp.allclose(out3, ref3, atol=1e-5, rtol=1e-5), "mismatch (B=300)"

    print("KERNEL_OK")
</pallas_src>

<mosaic_0001>
module attributes {stable_mosaic.version = 11 : i64} {
  func.func @_mlp_kernel(%arg0: i32, %arg1: memref<8x3xf32, #tpu.memory_space<vmem>>, %arg2: memref<3x64xf32, #tpu.memory_space<vmem>>, %arg3: memref<1x64xf32, #tpu.memory_space<vmem>>, %arg4: memref<64x64xf32, #tpu.memory_space<vmem>>, %arg5: memref<1x64xf32, #tpu.memory_space<vmem>>, %arg6: memref<64x64xf32, #tpu.memory_space<vmem>>, %arg7: memref<1x64xf32, #tpu.memory_space<vmem>>, %arg8: memref<64x2xf32, #tpu.memory_space<vmem>>, %arg9: memref<1x2xf32, #tpu.memory_space<vmem>>, %arg10: memref<8x2xf32, #tpu.memory_space<vmem>>) attributes {dimension_semantics = [#tpu.dimension_semantics<parallel>], iteration_bounds = array<i64: 1>, scalar_prefetch = 0 : i64, scratch_operands = 0 : i64, tpu.core_type = #tpu.core_type<tc>, window_params = [{transform_indices = @transform_0, window_bounds = array<i64: 8, 3>}, {pipeline_mode = #tpu.pipeline_mode<synchronous>, transform_indices = @transform_1, window_bounds = array<i64: 3, 64>}, {pipeline_mode = #tpu.pipeline_mode<synchronous>, transform_indices = @transform_2, window_bounds = array<i64: 1, 64>}, {pipeline_mode = #tpu.pipeline_mode<synchronous>, transform_indices = @transform_3, window_bounds = array<i64: 64, 64>}, {pipeline_mode = #tpu.pipeline_mode<synchronous>, transform_indices = @transform_4, window_bounds = array<i64: 1, 64>}, {pipeline_mode = #tpu.pipeline_mode<synchronous>, transform_indices = @transform_5, window_bounds = array<i64: 64, 64>}, {pipeline_mode = #tpu.pipeline_mode<synchronous>, transform_indices = @transform_6, window_bounds = array<i64: 1, 64>}, {pipeline_mode = #tpu.pipeline_mode<synchronous>, transform_indices = @transform_7, window_bounds = array<i64: 64, 2>}, {pipeline_mode = #tpu.pipeline_mode<synchronous>, transform_indices = @transform_8, window_bounds = array<i64: 1, 2>}, {transform_indices = @transform_9, window_bounds = array<i64: 8, 2>}]} {
    %c0 = arith.constant 0 : index
    %c0_0 = arith.constant 0 : index
    %0 = vector.load %arg1[%c0, %c0_0] : memref<8x3xf32, #tpu.memory_space<vmem>>, vector<8x3xf32>
    %c0_1 = arith.constant 0 : index
    %c0_2 = arith.constant 0 : index
    %1 = vector.load %arg2[%c0_1, %c0_2] : memref<3x64xf32, #tpu.memory_space<vmem>>, vector<3x64xf32>
    %c0_3 = arith.constant 0 : index
    %c0_4 = arith.constant 0 : index
    %2 = vector.load %arg3[%c0_3, %c0_4] : memref<1x64xf32, #tpu.memory_space<vmem>>, vector<1x64xf32>
    %3 = vector.extract_strided_slice %0 {offsets = [0, 0], sizes = [8, 1], strides = [1, 1]} : vector<8x3xf32> to vector<8x1xf32>
    %4 = vector.extract_strided_slice %1 {offsets = [0, 0], sizes = [1, 64], strides = [1, 1]} : vector<3x64xf32> to vector<1x64xf32>
    %5 = vector.broadcast %3 : vector<8x1xf32> to vector<8x64xf32>
    %6 = vector.broadcast %4 : vector<1x64xf32> to vector<8x64xf32>
    %7 = arith.mulf %5, %6 : vector<8x64xf32>
    %8 = vector.extract_strided_slice %0 {offsets = [0, 1], sizes = [8, 1], strides = [1, 1]} : vector<8x3xf32> to vector<8x1xf32>
    %9 = vector.extract_strided_slice %1 {offsets = [1, 0], sizes = [1, 64], strides = [1, 1]} : vector<3x64xf32> to vector<1x64xf32>
    %10 = vector.broadcast %8 : vector<8x1xf32> to vector<8x64xf32>
    %11 = vector.broadcast %9 : vector<1x64xf32> to vector<8x64xf32>
    %12 = arith.mulf %10, %11 : vector<8x64xf32>
    %13 = arith.addf %7, %12 : vector<8x64xf32>
    %14 = vector.extract_strided_slice %0 {offsets = [0, 2], sizes = [8, 1], strides = [1, 1]} : vector<8x3xf32> to vector<8x1xf32>
    %15 = vector.extract_strided_slice %1 {offsets = [2, 0], sizes = [1, 64], strides = [1, 1]} : vector<3x64xf32> to vector<1x64xf32>
    %16 = vector.broadcast %14 : vector<8x1xf32> to vector<8x64xf32>
    %17 = vector.broadcast %15 : vector<1x64xf32> to vector<8x64xf32>
    %18 = arith.mulf %16, %17 : vector<8x64xf32>
    %19 = arith.addf %13, %18 : vector<8x64xf32>
    %20 = vector.broadcast %2 : vector<1x64xf32> to vector<8x64xf32>
    %21 = arith.addf %19, %20 : vector<8x64xf32>
    %cst = arith.constant 0.000000e+00 : f32
    %22 = vector.broadcast %cst : f32 to vector<8x64xf32>
    %23 = arith.maximumf %21, %22 : vector<8x64xf32>
    %c0_5 = arith.constant 0 : index
    %c0_6 = arith.constant 0 : index
    %24 = vector.load %arg4[%c0_5, %c0_6] : memref<64x64xf32, #tpu.memory_space<vmem>>, vector<64x64xf32>
    %cst_7 = arith.constant dense<0.000000e+00> : vector<8x64xf32>
    %25 = tpu.matmul %23, %24, %cst_7 {dimension_numbers = #tpu.dot_dimension_numbers<[1], [0], [0], [1], [0, 0, 1, 1], [], []>} : vector<8x64xf32>, vector<64x64xf32>, vector<8x64xf32> -> vector<8x64xf32>
    %c0_8 = arith.constant 0 : index
    %c0_9 = arith.constant 0 : index
    %26 = vector.load %arg5[%c0_8, %c0_9] : memref<1x64xf32, #tpu.memory_space<vmem>>, vector<1x64xf32>
    %27 = vector.broadcast %26 : vector<1x64xf32> to vector<8x64xf32>
    %28 = arith.addf %25, %27 : vector<8x64xf32>
    %cst_10 = arith.constant 0.000000e+00 : f32
    %29 = vector.broadcast %cst_10 : f32 to vector<8x64xf32>
    %30 = arith.maximumf %28, %29 : vector<8x64xf32>
    %c0_11 = arith.constant 0 : index
    %c0_12 = arith.constant 0 : index
    %31 = vector.load %arg6[%c0_11, %c0_12] : memref<64x64xf32, #tpu.memory_space<vmem>>, vector<64x64xf32>
    %cst_13 = arith.constant dense<0.000000e+00> : vector<8x64xf32>
    %32 = tpu.matmul %30, %31, %cst_13 {dimension_numbers = #tpu.dot_dimension_numbers<[1], [0], [0], [1], [0, 0, 1, 1], [], []>} : vector<8x64xf32>, vector<64x64xf32>, vector<8x64xf32> -> vector<8x64xf32>
    %c0_14 = arith.constant 0 : index
    %c0_15 = arith.constant 0 : index
    %33 = vector.load %arg7[%c0_14, %c0_15] : memref<1x64xf32, #tpu.memory_space<vmem>>, vector<1x64xf32>
    %34 = vector.broadcast %33 : vector<1x64xf32> to vector<8x64xf32>
    %35 = arith.addf %32, %34 : vector<8x64xf32>
    %cst_16 = arith.constant 0.000000e+00 : f32
    %36 = vector.broadcast %cst_16 : f32 to vector<8x64xf32>
    %37 = arith.maximumf %35, %36 : vector<8x64xf32>
    %c0_17 = arith.constant 0 : index
    %c0_18 = arith.constant 0 : index
    %38 = vector.load %arg8[%c0_17, %c0_18] : memref<64x2xf32, #tpu.memory_space<vmem>>, vector<64x2xf32>
    %cst_19 = arith.constant dense<0.000000e+00> : vector<8x2xf32>
    %39 = tpu.matmul %37, %38, %cst_19 {dimension_numbers = #tpu.dot_dimension_numbers<[1], [0], [0], [1], [0, 0, 1, 1], [], []>} : vector<8x64xf32>, vector<64x2xf32>, vector<8x2xf32> -> vector<8x2xf32>
    %c0_20 = arith.constant 0 : index
    %c0_21 = arith.constant 0 : index
    %40 = vector.load %arg9[%c0_20, %c0_21] : memref<1x2xf32, #tpu.memory_space<vmem>>, vector<1x2xf32>
    %41 = vector.broadcast %40 : vector<1x2xf32> to vector<8x2xf32>
    %42 = arith.addf %39, %41 : vector<8x2xf32>
    %c0_22 = arith.constant 0 : index
    %c0_23 = arith.constant 0 : index
    %43 = vector.load %arg10[%c0_22, %c0_23] : memref<8x2xf32, #tpu.memory_space<vmem>>, vector<8x2xf32>
    tpu.vector_store %arg10[%c0_22, %c0_23], %42 {strides = array<i32>} : memref<8x2xf32, #tpu.memory_space<vmem>>, vector<8x2xf32>,
    return
  }
  func.func @transform_0(%arg0: i32) -> (i32, i32) {
    %c0_i32 = arith.constant 0 : i32
    %c0_i32_0 = arith.constant 0 : i32
    return %arg0, %c0_i32 : i32, i32
  }
  func.func @transform_1(%arg0: i32) -> (i32, i32) {
    %c0_i32 = arith.constant 0 : i32
    %c0_i32_0 = arith.constant 0 : i32
    %c0_i32_1 = arith.constant 0 : i32
    return %c0_i32, %c0_i32_0 : i32, i32
  }
  func.func @transform_2(%arg0: i32) -> (i32, i32) {
    %c0_i32 = arith.constant 0 : i32
    %c0_i32_0 = arith.constant 0 : i32
    %c0_i32_1 = arith.constant 0 : i32
    return %c0_i32, %c0_i32_0 : i32, i32
  }
  func.func @transform_3(%arg0: i32) -> (i32, i32) {
    %c0_i32 = arith.constant 0 : i32
    %c0_i32_0 = arith.constant 0 : i32
    %c0_i32_1 = arith.constant 0 : i32
    return %c0_i32, %c0_i32_0 : i32, i32
  }
  func.func @transform_4(%arg0: i32) -> (i32, i32) {
    %c0_i32 = arith.constant 0 : i32
    %c0_i32_0 = arith.constant 0 : i32
    %c0_i32_1 = arith.constant 0 : i32
    return %c0_i32, %c0_i32_0 : i32, i32
  }
  func.func @transform_5(%arg0: i32) -> (i32, i32) {
    %c0_i32 = arith.constant 0 : i32
    %c0_i32_0 = arith.constant 0 : i32
    %c0_i32_1 = arith.constant 0 : i32
    return %c0_i32, %c0_i32_0 : i32, i32
  }
  func.func @transform_6(%arg0: i32) -> (i32, i32) {
    %c0_i32 = arith.constant 0 : i32
    %c0_i32_0 = arith.constant 0 : i32
    %c0_i32_1 = arith.constant 0 : i32
    return %c0_i32, %c0_i32_0 : i32, i32
  }
  func.func @transform_7(%arg0: i32) -> (i32, i32) {
    %c0_i32 = arith.constant 0 : i32
    %c0_i32_0 = arith.constant 0 : i32
    %c0_i32_1 = arith.constant 0 : i32
    return %c0_i32, %c0_i32_0 : i32, i32
  }
  func.func @transform_8(%arg0: i32) -> (i32, i32) {
    %c0_i32 = arith.constant 0 : i32
    %c0_i32_0 = arith.constant 0 : i32
    %c0_i32_1 = arith.constant 0 : i32
    return %c0_i32, %c0_i32_0 : i32, i32
  }
  func.func @transform_9(%arg0: i32) -> (i32, i32) {
    %c0_i32 = arith.constant 0 : i32
    %c0_i32_0 = arith.constant 0 : i32
    return %arg0, %c0_i32 : i32, i32
  }
}

</mosaic_0001>

<llo_original>
// kernel: tpu_custom_call.1
$region0: #{tpu_custom_call.1}
  #allocation0 [shape = 'u32[]', space=smem, size = 0x4, offset = 0x4, fixed_abs, tag = 'smem constant byte address 0x4 - core index']
  #allocation1 [shape = 'u32[144,128]{1,0:T(1,128)}', space=vmem, size = 0x12000, scoped, tag = 'internal scratch']
  %s0 = inlined_call_operand.vmem [shape: f32[8,3], index: 0, kind: input, shape index: {}]
  %s1 = inlined_call_operand.vmem [shape: f32[3,64], index: 1, kind: input, shape index: {}]
  %s2 = inlined_call_operand.vmem [shape: f32[1,64], index: 2, kind: input, shape index: {}]
  %s3 = inlined_call_operand.vmem [shape: f32[64,64], index: 3, kind: input, shape index: {}]
  %s4 = inlined_call_operand.vmem [shape: f32[1,64], index: 4, kind: input, shape index: {}]
  %s5 = inlined_call_operand.hbm [shape: f32[64,64], index: 5, kind: input, shape index: {}]
  %s6 = inlined_call_operand.vmem [shape: f32[1,64], index: 6, kind: input, shape index: {}]
  %s7 = inlined_call_operand.vmem [shape: f32[64,2], index: 7, kind: input, shape index: {}]
  %s8 = inlined_call_operand.vmem [shape: f32[1,2], index: 8, kind: input, shape index: {}]
  %s9 = inlined_call_operand.vmem [shape: f32[8,2], index: 9, kind: output, shape index: {}]
  %s10 = sld [smem:[#allocation0]]
  $region50: #{tpu_custom_call.1} parent=0
    _
  %s12 = ssub.s32 1, %s10
  %s13 = scalar_select 0, %s12, %s10
  $region1: #{tpu_custom_call.1} parent=0
    #allocation2 [shape = 'u8[32768]{0}', space=vmem, size = 0x8000, scoped, tag = 'input window, operand 5, single buffered']
    #allocation3 [shape = 's32[1]{0}', space=sflag, size = 0x4, scoped, tag = 'scoped memory for tpu_custom_call.1']
    %14 = vsyncpa [#allocation3], 0
    // Predicated region
    $region2: #{tpu_custom_call.1} parent=1 // pred_check
      _
    $region3: #{tpu_custom_call.1} parent=1 // pred_check_branch
      %16 = sbr.rel (0) target = $region5
    $region4: #{tpu_custom_call.1} parent=1 // pred_region
      _
    $region5: #{tpu_custom_call.1} parent=1 // pred_fallthru
      _
    // Predicated region
    $region6: #{tpu_custom_call.1} parent=1 // pred_check
      _
    $region7: #{tpu_custom_call.1} parent=1 // pred_check_branch
      %18 = sbr.rel (0) target = $region9
    $region8: #{tpu_custom_call.1} parent=1 // pred_region
      _
    $region9: #{tpu_custom_call.1} parent=1 // pred_fallthru
      _
    // Predicated region
    $region10: #{tpu_custom_call.1} parent=1 // pred_check
      _
    $region11: #{tpu_custom_call.1} parent=1 // pred_check_branch
      %20 = sbr.rel (0) target = $region13
    $region12: #{tpu_custom_call.1} parent=1 // pred_region
      _
    $region13: #{tpu_custom_call.1} parent=1 // pred_fallthru
      _
    // Predicated region
    $region14: #{tpu_custom_call.1} parent=1 // pred_check
      _
    $region15: #{tpu_custom_call.1} parent=1 // pred_check_branch
      %22 = sbr.rel (0) target = $region17
    $region16: #{tpu_custom_call.1} parent=1 // pred_region
      _
    $region17: #{tpu_custom_call.1} parent=1 // pred_fallthru
      _
    // Predicated region
    $region18: #{tpu_custom_call.1} parent=1 // pred_check
      _
    $region19: #{tpu_custom_call.1} parent=1 // pred_check_branch
      %24 = sbr.rel (0) target = $region21
    $region20: #{tpu_custom_call.1} parent=1 // pred_region
      _
    $region21: #{tpu_custom_call.1} parent=1 // pred_fallthru
      _
    // Predicated region
    $region22: #{tpu_custom_call.1} parent=1 // pred_check
      _
    $region23: #{tpu_custom_call.1} parent=1 // pred_check_branch
      %26 = sbr.rel (0) target = $region25
    $region24: #{tpu_custom_call.1} parent=1 // pred_region
      %s28 = ssub.s32 1024, 1024
      %29 = vsyncadd [#allocation3], %s28
      %s30 = sshll.u32 [#allocation2], 4
      %s31 = int_to_ptr.vmem [resolvable:$true] %s30
      %36 = dma.hbm_to_vmem [thread:$0]  %s5, 1024, %s31, [#allocation3], 128, 128, 8
    $region25: #{tpu_custom_call.1} parent=1 // pred_fallthru
      _
    // Predicated region
    $region26: #{tpu_custom_call.1} parent=1 // pred_check
      _
    $region27: #{tpu_custom_call.1} parent=1 // pred_check_branch
      %38 = sbr.rel (0) target = $region29
    $region28: #{tpu_custom_call.1} parent=1 // pred_region
      _
    $region29: #{tpu_custom_call.1} parent=1 // pred_fallthru
      _
    // Predicated region
    $region30: #{tpu_custom_call.1} parent=1 // pred_check
      _
    $region31: #{tpu_custom_call.1} parent=1 // pred_check_branch
      %40 = sbr.rel (0) target = $region33
    $region32: #{tpu_custom_call.1} parent=1 // pred_region
      _
    $region33: #{tpu_custom_call.1} parent=1 // pred_fallthru
      _
    // Predicated region
    $region34: #{tpu_custom_call.1} parent=1 // pred_check
      _
    $region35: #{tpu_custom_call.1} parent=1 // pred_check_branch
      %42 = sbr.rel (0) target = $region37
    $region36: #{tpu_custom_call.1} parent=1 // pred_region
      _
    $region37: #{tpu_custom_call.1} parent=1 // pred_fallthru
      _
    // Predicated region
    $region38: #{tpu_custom_call.1} parent=1 // pred_check
      _
    $region39: #{tpu_custom_call.1} parent=1 // pred_check_branch
      %44 = sbr.rel (0) target = $region41
    $region40: #{tpu_custom_call.1} parent=1 // pred_region
      %45 = dma.done [#allocation3], 1024
    $region41: #{tpu_custom_call.1} parent=1 // pred_fallthru
      _
    %v46 = vld [vmem:[%s0] sm:$0xff]
    %v47 = vld [vmem:[%s1] sm:$0x7]
    %v48 = vld [vmem:[%s2] sm:$0x1]
    %50 = vset.pattern.permute.xlu0 0
    %51 = vperm.xlu0 %50, %v46
    %v52 = vpop.permute.xlu0 %51
    %v54 = vlaneseq
    %v55 = vshrl.u32 %v54, 7
    %v56 = vsub.s32 0, %v55
    %v57 = vrot.slane %v47, %v56
    %v58 = vmul.f32 %v52, %v57
    %59 = vset.pattern.permute.xlu0 1
    %60 = vperm.xlu0 %59, %v46
    %v61 = vpop.permute.xlu0 %60
    %v63 = vlaneseq
    %v64 = vshrl.u32 %v63, 7
    %v65 = vsub.s32 1, %v64
    %v66 = vrot.slane %v47, %v65
    %v67 = vmul.f32 %v61, %v66
    %v68 = vadd.f32 %v58, %v67
    %69 = vset.pattern.permute.xlu0 2
    %70 = vperm.xlu0 %69, %v46
    %v71 = vpop.permute.xlu0 %70
    %v73 = vlaneseq
    %v74 = vshrl.u32 %v73, 7
    %v75 = vsub.s32 2, %v74
    %v76 = vrot.slane %v47, %v75
    %v77 = vmul.f32 %v71, %v76
    %v78 = vadd.f32 %v68, %v77
    %v80 = vlaneseq
    %v81 = vshrl.u32 %v80, 7
    %v82 = vsub.s32 0, %v81
    %v83 = vrot.slane %v48, %v82
    %v85 = vadd.f32 %v78, %v83
    %v86 = vmax.f32 %v85, 0.0
    %v87 = vld [vmem:[%s3] sm:$0xff]
    %v88 = vld [vmem:[%s3 + $0x8] sm:$0xff]
    %v89 = vld [vmem:[%s3 + $0x10] sm:$0xff]
    %v90 = vld [vmem:[%s3 + $0x18] sm:$0xff]
    %v91 = vld [vmem:[%s3 + $0x20] sm:$0xff]
    %v92 = vld [vmem:[%s3 + $0x28] sm:$0xff]
    %v93 = vld [vmem:[%s3 + $0x30] sm:$0xff]
    %v94 = vld [vmem:[%s3 + $0x38] sm:$0xff]
    %v95 = vld [vmem:[%s4] sm:$0x1]
    %v97 = vlaneseq
    %v98 = vshrl.u32 %v97, 7
    %v99 = vsub.s32 0, %v98
    %v100 = vrot.slane %v95, %v99
    %vm102 = vcmask 523264
    %v104 = vsel %vm102, %v86, 0
    %106 = vmatprep.subr.mxu0 0.0
    %107 = vmatpush1.msra.mxu0 %v87
    %108 = vmatprep.subr.mxu0 0.0
    %109 = vmatpush1.msra.mxu0 %v88
    %110 = vmatprep.subr.mxu0 0.0
    %111 = vmatpush1.msra.mxu0 %v89
    %112 = vmatprep.subr.mxu0 0.0
    %113 = vmatpush1.msra.mxu0 %v90
    %114 = vmatprep.subr.mxu0 0.0
    %115 = vmatpush1.msra.mxu0 %v91
    %116 = vmatprep.subr.mxu0 0.0
    %117 = vmatpush1.msra.mxu0 %v92
    %118 = vmatprep.subr.mxu0 0.0
    %119 = vmatpush1.msra.mxu0 %v93
    %120 = vmatprep.subr.mxu0 0.0
    %121 = vmatpush1.msra.mxu0 %v94
    %122 = vmatprep.subr.mxu0 0.0
    %123 = vmatpush1.msra.mxu0 0.0
    %124 = vmatprep.subr.mxu0 0.0
    %125 = vmatpush1.msra.mxu0 0.0
    %126 = vmatprep.subr.mxu0 0.0
    %127 = vmatpush1.msra.mxu0 0.0
    %128 = vmatprep.subr.mxu0 0.0
    %129 = vmatpush1.msra.mxu0 0.0
    %130 = vmatprep.subr.mxu0 0.0
    %131 = vmatpush1.msra.mxu0 0.0
    %132 = vmatprep.subr.mxu0 0.0
    %133 = vmatpush1.msra.mxu0 0.0
    %134 = vmatprep.subr.mxu0 0.0
    %135 = vmatpush1.msra.mxu0 0.0
    %136 = vmatprep.subr.mxu0 0.0
    %137 = vmatpush1.msra.mxu0 0.0
    %138 = vmatprep.subr.mxu0 0.0
    %139 = vmatpush1.msra.mxu0 0.0
    %140 = vmatprep.subr.mxu0 0.0
    %141 = vmatpush1.msra.mxu0 0.0
    %142 = vmatprep.subr.mxu0 0.0
    %143 = vmatpush1.msra.mxu0 0.0
    %144 = vmatprep.subr.mxu0 0.0
    %145 = vmatpush1.msra.mxu0 0.0
    %146 = vmatprep.subr.mxu0 0.0
    %147 = vmatpush1.msra.mxu0 0.0
    %148 = vmatprep.subr.mxu0 0.0
    %149 = vmatpush1.msra.mxu0 0.0
    %150 = vmatprep.subr.mxu0 0.0
    %151 = vmatpush1.msra.mxu0 0.0
    %152 = vmatprep.subr.mxu0 0.0
    %153 = vmatpush1.msra.mxu0 0.0
    %154 = vmatprep.subr.mxu0 0.0
    %155 = vmatpush1.msra.mxu0 0.0
    %156 = vmatprep.subr.mxu0 0.0
    %157 = vmatpush1.msra.mxu0 0.0
    %158 = vmatprep.subr.mxu0 0.0
    %159 = vmatpush1.msra.mxu0 0.0
    %160 = vmatprep.subr.mxu0 0.0
    %161 = vmatpush1.msra.mxu0 0.0
    %162 = vmatprep.subr.mxu0 0.0
    %163 = vmatpush1.msra.mxu0 0.0
    %164 = vmatprep.subr.mxu0 0.0
    %165 = vmatpush1.msra.mxu0 0.0
    %166 = vmatprep.subr.mxu0 0.0
    %167 = vmatpush1.msra.mxu0 0.0
    %168 = vmatprep.subr.mxu0 0.0
    %169 = vmatpush1.msra.mxu0 0.0
    %170 = vmatprep.mubr.f32.mxu0 0.0
    %171 = vmatmul.mubr.f32.gmra.mrb[0].mxu0 %v104
    %v172 = vpop.f32.mrb[0].mxu0
    %v173 = vadd.f32 %v100, %v172
    %v174 = vpop.f32.mrb[0].mxu0
    %175 = vdwg.mxu0
    %v176 = vmax.f32 %v173, 0.0
    %v177 = vld [vmem:[#allocation2] sm:$0xff]
    %v178 = vld [vmem:[#allocation2 + $0x8] sm:$0xff]
    %v179 = vld [vmem:[#allocation2 + $0x10] sm:$0xff]
    %v180 = vld [vmem:[#allocation2 + $0x18] sm:$0xff]
    %v181 = vld [vmem:[#allocation2 + $0x20] sm:$0xff]
    %v182 = vld [vmem:[#allocation2 + $0x28] sm:$0xff]
    %v183 = vld [vmem:[#allocation2 + $0x30] sm:$0xff]
    %v184 = vld [vmem:[#allocation2 + $0x38] sm:$0xff]
    %v185 = vld [vmem:[%s6] sm:$0x1]
    %v187 = vlaneseq
    %v188 = vshrl.u32 %v187, 7
    %v189 = vsub.s32 0, %v188
    %v190 = vrot.slane %v185, %v189
    %v193 = vsel %vm102, %v176, 0
    %195 = vmatprep.subr.mxu0 0.0
    %196 = vmatpush1.msra.mxu0 %v177
    %197 = vmatprep.subr.mxu0 0.0
    %198 = vmatpush1.msra.mxu0 %v178
    %199 = vmatprep.subr.mxu0 0.0
    %200 = vmatpush1.msra.mxu0 %v179
    %201 = vmatprep.subr.mxu0 0.0
    %202 = vmatpush1.msra.mxu0 %v180
    %203 = vmatprep.subr.mxu0 0.0
    %204 = vmatpush1.msra.mxu0 %v181
    %205 = vmatprep.subr.mxu0 0.0
    %206 = vmatpush1.msra.mxu0 %v182
    %207 = vmatprep.subr.mxu0 0.0
    %208 = vmatpush1.msra.mxu0 %v183
    %209 = vmatprep.subr.mxu0 0.0
    %210 = vmatpush1.msra.mxu0 %v184
    %211 = vmatprep.subr.mxu0 0.0
    %212 = vmatpush1.msra.mxu0 0.0
    %213 = vmatprep.subr.mxu0 0.0
    %214 = vmatpush1.msra.mxu0 0.0
    %215 = vmatprep.subr.mxu0 0.0
    %216 = vmatpush1.msra.mxu0 0.0
    %217 = vmatprep.subr.mxu0 0.0
    %218 = vmatpush1.msra.mxu0 0.0
    %219 = vmatprep.subr.mxu0 0.0
    %220 = vmatpush1.msra.mxu0 0.0
    %221 = vmatprep.subr.mxu0 0.0
    %222 = vmatpush1.msra.mxu0 0.0
    %223 = vmatprep.subr.mxu0 0.0
    %224 = vmatpush1.msra.mxu0 0.0
    %225 = vmatprep.subr.mxu0 0.0
    %226 = vmatpush1.msra.mxu0 0.0
    %227 = vmatprep.subr.mxu0 0.0
    %228 = vmatpush1.msra.mxu0 0.0
    %229 = vmatprep.subr.mxu0 0.0
    %230 = vmatpush1.msra.mxu0 0.0
    %231 = vmatprep.subr.mxu0 0.0
    %232 = vmatpush1.msra.mxu0 0.0
    %233 = vmatprep.subr.mxu0 0.0
    %234 = vmatpush1.msra.mxu0 0.0
    %235 = vmatprep.subr.mxu0 0.0
    %236 = vmatpush1.msra.mxu0 0.0
    %237 = vmatprep.subr.mxu0 0.0
    %238 = vmatpush1.msra.mxu0 0.0
    %239 = vmatprep.subr.mxu0 0.0
    %240 = vmatpush1.msra.mxu0 0.0
    %241 = vmatprep.subr.mxu0 0.0
    %242 = vmatpush1.msra.mxu0 0.0
    %243 = vmatprep.subr.mxu0 0.0
    %244 = vmatpush1.msra.mxu0 0.0
    %245 = vmatprep.subr.mxu0 0.0
    %246 = vmatpush1.msra.mxu0 0.0
    %247 = vmatprep.subr.mxu0 0.0
    %248 = vmatpush1.msra.mxu0 0.0
    %249 = vmatprep.subr.mxu0 0.0
    %250 = vmatpush1.msra.mxu0 0.0
    %251 = vmatprep.subr.mxu0 0.0
    %252 = vmatpush1.msra.mxu0 0.0
    %253 = vmatprep.subr.mxu0 0.0
    %254 = vmatpush1.msra.mxu0 0.0
    %255 = vmatprep.subr.mxu0 0.0
    %256 = vmatpush1.msra.mxu0 0.0
    %257 = vmatprep.subr.mxu0 0.0
    %258 = vmatpush1.msra.mxu0 0.0
    %259 = vmatprep.mubr.f32.mxu0 0.0
    %260 = vmatmul.mubr.f32.gmra.mrb[0].mxu0 %v193
    %v261 = vpop.f32.mrb[0].mxu0
    %v262 = vadd.f32 %v190, %v261
    %v263 = vpop.f32.mrb[0].mxu0
    %264 = vdwg.mxu0
    %v265 = vmax.f32 %v262, 0.0
    %v266 = vld [vmem:[%s7] sm:$0xff]
    %v267 = vld [vmem:[%s7 + $0x8] sm:$0xff]
    %v268 = vld [vmem:[%s7 + $0x10] sm:$0xff]
    %v269 = vld [vmem:[%s7 + $0x18] sm:$0xff]
    %v270 = vld [vmem:[%s7 + $0x20] sm:$0xff]
    %v271 = vld [vmem:[%s7 + $0x28] sm:$0xff]
    %v272 = vld [vmem:[%s7 + $0x30] sm:$0xff]
    %v273 = vld [vmem:[%s7 + $0x38] sm:$0xff]
    %v274 = vld [vmem:[%s8] sm:$0x1]
    %v276 = vlaneseq
    %v277 = vshrl.u32 %v276, 7
    %v278 = vsub.s32 0, %v277
    %v279 = vrot.slane %v274, %v278
    %v282 = vsel %vm102, %v265, 0
    %284 = vmatprep.subr.mxu0 0.0
    %285 = vmatpush1.msra.mxu0 %v266
    %286 = vmatprep.subr.mxu0 0.0
    %287 = vmatpush1.msra.mxu0 %v267
    %288 = vmatprep.subr.mxu0 0.0
    %289 = vmatpush1.msra.mxu0 %v268
    %290 = vmatprep.subr.mxu0 0.0
    %291 = vmatpush1.msra.mxu0 %v269
    %292 = vmatprep.subr.mxu0 0.0
    %293 = vmatpush1.msra.mxu0 %v270
    %294 = vmatprep.subr.mxu0 0.0
    %295 = vmatpush1.msra.mxu0 %v271
    %296 = vmatprep.subr.mxu0 0.0
    %297 = vmatpush1.msra.mxu0 %v272
    %298 = vmatprep.subr.mxu0 0.0
    %299 = vmatpush1.msra.mxu0 %v273
    %300 = vmatprep.subr.mxu0 0.0
    %301 = vmatpush1.msra.mxu0 0.0
    %302 = vmatprep.subr.mxu0 0.0
    %303 = vmatpush1.msra.mxu0 0.0
    %304 = vmatprep.subr.mxu0 0.0
    %305 = vmatpush1.msra.mxu0 0.0
    %306 = vmatprep.subr.mxu0 0.0
    %307 = vmatpush1.msra.mxu0 0.0
    %308 = vmatprep.subr.mxu0 0.0
    %309 = vmatpush1.msra.mxu0 0.0
    %310 = vmatprep.subr.mxu0 0.0
    %311 = vmatpush1.msra.mxu0 0.0
    %312 = vmatprep.subr.mxu0 0.0
    %313 = vmatpush1.msra.mxu0 0.0
    %314 = vmatprep.subr.mxu0 0.0
    %315 = vmatpush1.msra.mxu0 0.0
    %316 = vmatprep.subr.mxu0 0.0
    %317 = vmatpush1.msra.mxu0 0.0
    %318 = vmatprep.subr.mxu0 0.0
    %319 = vmatpush1.msra.mxu0 0.0
    %320 = vmatprep.subr.mxu0 0.0
    %321 = vmatpush1.msra.mxu0 0.0
    %322 = vmatprep.subr.mxu0 0.0
    %323 = vmatpush1.msra.mxu0 0.0
    %324 = vmatprep.subr.mxu0 0.0
    %325 = vmatpush1.msra.mxu0 0.0
    %326 = vmatprep.subr.mxu0 0.0
    %327 = vmatpush1.msra.mxu0 0.0
    %328 = vmatprep.subr.mxu0 0.0
    %329 = vmatpush1.msra.mxu0 0.0
    %330 = vmatprep.subr.mxu0 0.0
    %331 = vmatpush1.msra.mxu0 0.0
    %332 = vmatprep.subr.mxu0 0.0
    %333 = vmatpush1.msra.mxu0 0.0
    %334 = vmatprep.subr.mxu0 0.0
    %335 = vmatpush1.msra.mxu0 0.0
    %336 = vmatprep.subr.mxu0 0.0
    %337 = vmatpush1.msra.mxu0 0.0
    %338 = vmatprep.subr.mxu0 0.0
    %339 = vmatpush1.msra.mxu0 0.0
    %340 = vmatprep.subr.mxu0 0.0
    %341 = vmatpush1.msra.mxu0 0.0
    %342 = vmatprep.subr.mxu0 0.0
    %343 = vmatpush1.msra.mxu0 0.0
    %344 = vmatprep.subr.mxu0 0.0
    %345 = vmatpush1.msra.mxu0 0.0
    %346 = vmatprep.subr.mxu0 0.0
    %347 = vmatpush1.msra.mxu0 0.0
    %348 = vmatprep.mubr.f32.mxu0 0.0
    %349 = vmatmul.mubr.f32.gmra.mrb[0].mxu0 %v282
    %v350 = vpop.f32.mrb[0].mxu0
    %v351 = vadd.f32 %v279, %v350
    %v352 = vpop.f32.mrb[0].mxu0
    %353 = vdwg.mxu0
    %vm354 = vcmask 15360
    %355 = vst.msk [vmem:[%s9] sm:$0xff] %vm354, %v351
    // Predicated region
    $region42: #{tpu_custom_call.1} parent=1 // pred_check
      _
    $region43: #{tpu_custom_call.1} parent=1 // pred_check_branch
      %357 = sbr.rel (0) target = $region45
    $region44: #{tpu_custom_call.1} parent=1 // pred_region
      _
    $region45: #{tpu_custom_call.1} parent=1 // pred_fallthru
      _
    // Predicated region
    $region46: #{tpu_custom_call.1} parent=1 // pred_check
      _
    $region47: #{tpu_custom_call.1} parent=1 // pred_check_branch
      %359 = sbr.rel (0) target = $region49
    $region48: #{tpu_custom_call.1} parent=1 // pred_region
      _
    $region49: #{tpu_custom_call.1} parent=1 // pred_fallthru
      _
    %360 = vsyncpa [#allocation3], 1

</llo_original>
